<compile_context>
chip_gen: v6e
topology: v6e:2x2x1
jax: 0.10.0
libtpu: 0.0.40
codegen_flags: <defaults>
</compile_context>

<pallas_src>
import jax
import jax.numpy as jnp
from jax import lax
from jax.experimental import pallas as pl
from jax.experimental.pallas import tpu as pltpu

# small, deterministic problem sizes consistent with the module
B = 2      # batch
L = 8      # max caption length (timesteps of logits / targets)
V = 128    # vocab / class dim (chosen lane-dense = 128 for the demo)


# -----------------------------------------------------------------------------
# Kernel: fused length-masked mean cross-entropy.
#   x_ref   : (B, L, V)  f32 logits                     (VMEM)
#   y_ref   : (B, L, 1)  int32 target token ids         (VMEM)
#   len_ref : (B, 1, 1)  int32 sequence lengths         (VMEM)
#   loss_ref: (1, 1)     f32 mean loss over valid toks  (VMEM)
# -----------------------------------------------------------------------------
def lossfun_kernel(x_ref, y_ref, len_ref, loss_ref):
    x = x_ref[...]                                   # (B, L, V) f32
    y = y_ref[...]                                   # (B, L, 1) int32
    lens = len_ref[...]                              # (B, 1, 1) int32
    bsz, seq, _ = x.shape

    # stable log-softmax normalizer per (b, t) row
    m = jnp.max(x, axis=-1, keepdims=True)                                   # (B, L, 1)
    lse = m + jnp.log(jnp.sum(jnp.exp(x - m), axis=-1, keepdims=True))       # (B, L, 1)

    # pick the target-class logit via lane-iota compare + masked lane reduce
    lane = lax.broadcasted_iota(jnp.int32, x.shape, 2)                       # (B, L, V)
    tgt_logit = jnp.sum(jnp.where(lane == y, x, 0.0), axis=-1, keepdims=True)

    nll = lse - tgt_logit                                                    # (B, L, 1)

    # validity mask replaces the per-batch slice + concat of the torch code:
    # position t of batch b contributes iff t < lengths[b] - 1
    t_idx = lax.broadcasted_iota(jnp.int32, (bsz, seq, 1), 1)
    valid = (t_idx < (lens - 1)).astype(jnp.float32)                         # (B, L, 1)

    # mean over all valid (concatenated) tokens == CrossEntropyLoss default
    flat_nll = (nll * valid).reshape(bsz * seq, 1)                           # (B*L, 1)
    flat_valid = valid.reshape(bsz * seq, 1)
    total = jnp.sum(flat_nll, axis=0, keepdims=True)                         # (1, 1)
    count = jnp.sum(flat_valid, axis=0, keepdims=True)                       # (1, 1)
    loss_ref[...] = total / count


# -----------------------------------------------------------------------------
# Wrapper (plain-JAX glue: dtype casts, pallas_call plumbing)
# -----------------------------------------------------------------------------
def loss_fun(x, y, lengths):
    """Returns (loss, avg_loss) matching LossFun.forward / LossFun.avg_loss."""
    bsz = x.shape[0]
    x_f32 = x.astype(jnp.float32)                       # (B, L, V)
    y3 = y.astype(jnp.int32)[:, :, None]                # (B, L, 1)
    lens3 = lengths.astype(jnp.int32)[:, None, None]    # (B, 1, 1)

    out = pl.pallas_call(
        lossfun_kernel,
        out_shape=jax.ShapeDtypeStruct((1, 1), jnp.float32),
        in_specs=[pl.BlockSpec(memory_space=pltpu.MemorySpace.VMEM),
                  pl.BlockSpec(memory_space=pltpu.MemorySpace.VMEM),
                  pl.BlockSpec(memory_space=pltpu.MemorySpace.VMEM)],
        out_specs=pl.BlockSpec(memory_space=pltpu.MemorySpace.VMEM),
    )(x_f32, y3, lens3)

    loss = out[0, 0]
    avg_loss = loss / bsz
    return loss, avg_loss


loss_fun_jit = jax.jit(loss_fun)


# -----------------------------------------------------------------------------
# Pure-JAX reference (mirrors the torch slice + cat + CrossEntropyLoss exactly)
# -----------------------------------------------------------------------------
def ref_lossfun(x, y, lengths):
    preds, gts = [], []
    for b in range(x.shape[0]):
        n = int(lengths[b]) - 1
        preds.append(x[b, :n])
        gts.append(y[b, :n])
    logits = jnp.concatenate(preds, axis=0)
    tgt = jnp.concatenate(gts, axis=0).astype(jnp.int32)
    logp = jax.nn.log_softmax(logits.astype(jnp.float32), axis=-1)
    nll = -jnp.take_along_axis(logp, tgt[:, None], axis=-1)[:, 0]
    return jnp.mean(nll)


if __name__ == "__main__":
    key = jax.random.PRNGKey(0)
    kx, ky = jax.random.split(key)

    x = jax.random.normal(kx, (B, L, V), jnp.float32)            # per-step logits
    y = jax.random.randint(ky, (B, L), 0, V, jnp.int32)          # ground-truth ids
    lengths = jnp.array([8, 5], jnp.int32)                       # per-sample lengths

    loss, avg_loss = loss_fun_jit(x, y, lengths)
    jax.block_until_ready((loss, avg_loss))

    ref = ref_lossfun(x, y, lengths)

    assert loss.shape == ()
    assert bool(jnp.isfinite(loss))
    assert float(jnp.abs(loss - ref)) < 1e-4, (float(loss), float(ref))
    assert float(jnp.abs(avg_loss - ref / B)) < 1e-4

    print("KERNEL_OK")
</pallas_src>

<mosaic_0001>
module attributes {stable_mosaic.version = 11 : i64} {
  func.func @lossfun_kernel(%arg0: memref<2x8x128xf32, #tpu.memory_space<vmem>>, %arg1: memref<2x8x1xi32, #tpu.memory_space<vmem>>, %arg2: memref<2x1x1xi32, #tpu.memory_space<vmem>>, %arg3: memref<1x1xf32, #tpu.memory_space<vmem>>) attributes {dimension_semantics = [], scalar_prefetch = 0 : i64, scratch_operands = 0 : i64, tpu.core_type = #tpu.core_type<tc>} {
    %c0 = arith.constant 0 : index
    %c0_0 = arith.constant 0 : index
    %c0_1 = arith.constant 0 : index
    %0 = vector.load %arg0[%c0, %c0_0, %c0_1] : memref<2x8x128xf32, #tpu.memory_space<vmem>>, vector<2x8x128xf32>
    %c0_2 = arith.constant 0 : index
    %c0_3 = arith.constant 0 : index
    %c0_4 = arith.constant 0 : index
    %1 = vector.load %arg1[%c0_2, %c0_3, %c0_4] : memref<2x8x1xi32, #tpu.memory_space<vmem>>, vector<2x8x1xi32>
    %c0_5 = arith.constant 0 : index
    %c0_6 = arith.constant 0 : index
    %c0_7 = arith.constant 0 : index
    %2 = vector.load %arg2[%c0_5, %c0_6, %c0_7] : memref<2x1x1xi32, #tpu.memory_space<vmem>>, vector<2x1x1xi32>
    %cst = arith.constant dense<0xFF800000> : vector<2x8xf32>
    %3 = vector.multi_reduction <maximumf>, %0, %cst [2] : vector<2x8x128xf32> to vector<2x8xf32>
    %4 = vector.shape_cast %3 : vector<2x8xf32> to vector<2x8x1xf32>
    %5 = vector.broadcast %4 : vector<2x8x1xf32> to vector<2x8x128xf32>
    %6 = arith.subf %0, %5 : vector<2x8x128xf32>
    %7 = math.exp %6 : vector<2x8x128xf32>
    %cst_8 = arith.constant dense<0.000000e+00> : vector<2x8xf32>
    %8 = vector.multi_reduction <add>, %7, %cst_8 [2] : vector<2x8x128xf32> to vector<2x8xf32>
    %9 = vector.shape_cast %8 : vector<2x8xf32> to vector<2x8x1xf32>
    %10 = math.log %9 : vector<2x8x1xf32>
    %11 = arith.addf %4, %10 : vector<2x8x1xf32>
    %12 = tpu.iota {dimensions = array<i32: 2>} : vector<2x8x128xi32>
    %13 = vector.broadcast %1 : vector<2x8x1xi32> to vector<2x8x128xi32>
    %14 = arith.cmpi eq, %12, %13 : vector<2x8x128xi32>
    %cst_9 = arith.constant 0.000000e+00 : f32
    %15 = vector.broadcast %cst_9 : f32 to vector<2x8x128xf32>
    %16 = arith.select %14, %0, %15 : vector<2x8x128xi1>, vector<2x8x128xf32>
    %cst_10 = arith.constant dense<0.000000e+00> : vector<2x8xf32>
    %17 = vector.multi_reduction <add>, %16, %cst_10 [2] : vector<2x8x128xf32> to vector<2x8xf32>
    %18 = vector.shape_cast %17 : vector<2x8xf32> to vector<2x8x1xf32>
    %19 = arith.subf %11, %18 : vector<2x8x1xf32>
    %20 = tpu.iota {dimensions = array<i32: 1>} : vector<2x8x1xi32>
    %c1_i32 = arith.constant 1 : i32
    %21 = vector.broadcast %c1_i32 : i32 to vector<2x1x1xi32>
    %22 = arith.subi %2, %21 : vector<2x1x1xi32>
    %23 = vector.broadcast %22 : vector<2x1x1xi32> to vector<2x8x1xi32>
    %24 = arith.cmpi slt, %20, %23 : vector<2x8x1xi32>
    %25 = arith.extui %24 : vector<2x8x1xi1> to vector<2x8x1xi32>
    %26 = arith.sitofp %25 : vector<2x8x1xi32> to vector<2x8x1xf32>
    %27 = arith.mulf %19, %26 : vector<2x8x1xf32>
    %28 = vector.shape_cast %27 : vector<2x8x1xf32> to vector<16x1xf32>
    %29 = vector.shape_cast %26 : vector<2x8x1xf32> to vector<16x1xf32>
    %cst_11 = arith.constant dense<0.000000e+00> : vector<1xf32>
    %30 = vector.multi_reduction <add>, %28, %cst_11 [0] : vector<16x1xf32> to vector<1xf32>
    %31 = vector.shape_cast %30 : vector<1xf32> to vector<1x1xf32>
    %cst_12 = arith.constant dense<0.000000e+00> : vector<1xf32>
    %32 = vector.multi_reduction <add>, %29, %cst_12 [0] : vector<16x1xf32> to vector<1xf32>
    %33 = vector.shape_cast %32 : vector<1xf32> to vector<1x1xf32>
    %34 = arith.divf %31, %33 : vector<1x1xf32>
    %c0_13 = arith.constant 0 : index
    %c0_14 = arith.constant 0 : index
    %35 = vector.load %arg3[%c0_13, %c0_14] : memref<1x1xf32, #tpu.memory_space<vmem>>, vector<1x1xf32>
    tpu.vector_store %arg3[%c0_13, %c0_14], %34 {strides = array<i32>} : memref<1x1xf32, #tpu.memory_space<vmem>>, vector<1x1xf32>,
    return
  }
}

</mosaic_0001>

<llo_original>
// kernel: loss_fun.1
$region0: #{loss_fun.1}
  #allocation0 [shape = 'u32[]', space=smem, size = 0x4, offset = 0x4, fixed_abs, tag = 'smem constant byte address 0x4 - core index']
  #allocation1 [shape = 'u32[144,128]{1,0:T(1,128)}', space=vmem, size = 0x12000, scoped, tag = 'internal scratch']
  %s0 = inlined_call_operand.vmem [shape: f32[2,8,128], index: 0, kind: input, shape index: {}]
  %s1 = inlined_call_operand.vmem [shape: s32[2,8,1], index: 1, kind: input, shape index: {}]
  %s2 = inlined_call_operand.vmem [shape: s32[2,1,1], index: 2, kind: input, shape index: {}]
  %s3 = inlined_call_operand.hbm [shape: f32[1,1], index: 3, kind: output, shape index: {}]
  %s4 = sld [smem:[#allocation0]]
  $region22: #{loss_fun.1} parent=0
    _
  %s6 = ssub.s32 1, %s4
  %s7 = scalar_select 0, %s6, %s4
  $region1: #{loss_fun.1} parent=0
    #allocation2 [shape = 'u8[512]{0}', space=vmem, size = 0x400, scoped, tag = 'output window, operand 0, single buffered']
    #allocation3 [shape = 's32[1]{0}', space=sflag, size = 0x4, scoped, tag = 'scoped memory for loss_fun.1']
    %8 = vsyncpa [#allocation3], 0
    // Predicated region
    $region2: #{loss_fun.1} parent=1 // pred_check
      _
    $region3: #{loss_fun.1} parent=1 // pred_check_branch
      %10 = sbr.rel (0) target = $region5
    $region4: #{loss_fun.1} parent=1 // pred_region
      _
    $region5: #{loss_fun.1} parent=1 // pred_fallthru
      _
    // Predicated region
    $region6: #{loss_fun.1} parent=1 // pred_check
      _
    $region7: #{loss_fun.1} parent=1 // pred_check_branch
      %12 = sbr.rel (0) target = $region9
    $region8: #{loss_fun.1} parent=1 // pred_region
      _
    $region9: #{loss_fun.1} parent=1 // pred_fallthru
      _
    // Predicated region
    $region10: #{loss_fun.1} parent=1 // pred_check
      _
    $region11: #{loss_fun.1} parent=1 // pred_check_branch
      %14 = sbr.rel (0) target = $region13
    $region12: #{loss_fun.1} parent=1 // pred_region
      _
    $region13: #{loss_fun.1} parent=1 // pred_fallthru
      _
    %v15 = vld [vmem:[%s0] sm:$0xff]
    %v16 = vld [vmem:[%s0 + $0x8] sm:$0xff]
    %v17 = vld [vmem:[%s1] sm:$0xff]
    %v18 = vld [vmem:[%s1 + $0x8] sm:$0xff]
    %v19 = vld [vmem:[%s2] sm:$0x1]
    %v20 = vld [vmem:[%s2 + $0x1] sm:$0x1]
    %21 = vmax.xlane.f32.xlu0 %v15
    %v22 = vpop.xlane.xlu0 %21
    %23 = vmax.xlane.f32.xlu0 %v16
    %v24 = vpop.xlane.xlu0 %23
    %v25 = vsub.f32 %v15, %v22
    %v26 = vsub.f32 %v16, %v24
    %v27 = vmul.f32 %v25, 1.442695
    %v28 = vpow.pop %v27
    %v29 = vmul.f32 %v26, 1.442695
    %v30 = vpow.pop %v29
    %31 = vadd.xlane.f32.xlu0 %v28
    %v32 = vpop.xlane.xlu0 %31
    %33 = vadd.xlane.f32.xlu0 %v30
    %v34 = vpop.xlane.xlu0 %33
    %v35 = vlog2.pop %v32
    %v36 = vmul.f32 %v35, 0.6931472
    %v37 = vlog2.pop %v34
    %v38 = vmul.f32 %v37, 0.6931472
    %v39 = vadd.f32 %v22, %v36
    %v40 = vadd.f32 %v24, %v38
    %v41 = vlaneseq
    %v42 = vand.u32 %v41, 127
    %43 = vset.pattern.permute.xlu0 0
    %44 = vperm.xlu0 %43, %v17
    %v45 = vpop.permute.xlu0 %44
    %46 = vset.pattern.permute.xlu0 0
    %47 = vperm.xlu0 %46, %v18
    %v48 = vpop.permute.xlu0 %47
    %vm49 = vcmp.eq.s32.totalorder %v42, %v45
    %vm50 = vcmp.eq.s32.totalorder %v42, %v48
    %v51 = vsel %vm49, %v15, 0.0
    %v52 = vsel %vm50, %v16, 0.0
    %53 = vadd.xlane.f32.xlu0 %v51
    %v54 = vpop.xlane.xlu0 %53
    %55 = vadd.xlane.f32.xlu0 %v52
    %v56 = vpop.xlane.xlu0 %55
    %v57 = vsub.f32 %v39, %v54
    %v58 = vsub.f32 %v40, %v56
    %v59 = vlaneseq
    %v60 = vshrl.u32 %v59, 7
    %v61 = vsub.s32 %v19, 1
    %v62 = vsub.s32 %v20, 1
    %v63 = vlaneseq
    %v64 = vshrl.u32 %v63, 7
    %v65 = vsub.s32 0, %v64
    %v66 = vrot.slane %v61, %v65
    %v67 = vlaneseq
    %v68 = vshrl.u32 %v67, 7
    %v69 = vsub.s32 0, %v68
    %v70 = vrot.slane %v62, %v69
    %vm71 = vcmp.lt.s32.totalorder %v60, %v66
    %vm72 = vcmp.lt.s32.totalorder %v60, %v70
    %v73 = vsel %vm71, 1, 0
    %v74 = vsel %vm72, 1, 0
    %v75 = vcvt.s32.f32 %v73
    %v76 = vcvt.s32.f32 %v74
    %v77 = vmul.f32 %v57, %v75
    %v78 = vmul.f32 %v58, %v76
    %vm79 = vcmask 7168
    %v80 = vsel %vm79, %v77, 0.0
    %v81 = vsel %vm79, %v78, 0.0
    %v82 = vadd.f32 %v80, %v81
    %v83 = vrot.slane %v82, 4
    %v84 = vadd.f32 %v82, %v83
    %v85 = vrot.slane %v84, 2
    %v86 = vadd.f32 %v84, %v85
    %v87 = vrot.slane %v86, 1
    %v88 = vadd.f32 %v86, %v87
    %v89 = vsel %vm79, %v75, 0.0
    %v90 = vsel %vm79, %v76, 0.0
    %v91 = vadd.f32 %v89, %v90
    %v92 = vrot.slane %v91, 4
    %v93 = vadd.f32 %v91, %v92
    %v94 = vrot.slane %v93, 2
    %v95 = vadd.f32 %v93, %v94
    %v96 = vrot.slane %v95, 1
    %v97 = vadd.f32 %v95, %v96
    %v98 = vrcp.pop %v97
    %v99 = vmul.f32 %v88, %v98
    %vm100 = vcmask 0
    %101 = vst.msk [vmem:[#allocation2] sm:$0x1] %vm100, %v99
    // Predicated region
    $region14: #{loss_fun.1} parent=1 // pred_check
      _
    $region15: #{loss_fun.1} parent=1 // pred_check_branch
      %103 = sbr.rel (0) target = $region17
    $region16: #{loss_fun.1} parent=1 // pred_region
      %s105 = ssub.s32 16, 16
      %106 = vsyncadd [#allocation3], %s105
      %s108 = sshll.u32 [#allocation2], 4
      %s109 = int_to_ptr.vmem [resolvable:$true] %s108
      %111 = dma.vmem_to_hbm [thread:$0]  %s109, 16, %s3, [#allocation3]
    $region17: #{loss_fun.1} parent=1 // pred_fallthru
      _
    // Predicated region
    $region18: #{loss_fun.1} parent=1 // pred_check
      _
    $region19: #{loss_fun.1} parent=1 // pred_check_branch
      %113 = sbr.rel (0) target = $region21
    $region20: #{loss_fun.1} parent=1 // pred_region
      %114 = dma.done [#allocation3], 16
    $region21: #{loss_fun.1} parent=1 // pred_fallthru
      _
    %115 = vsyncpa [#allocation3], 1

</llo_original>
